<compile_context>
chip_gen: v7x
topology: tpu7x:2x2x1
jax: 0.10.0
libtpu: 0.0.40
codegen_flags: <defaults>
</compile_context>

<pallas_src>
import jax
import jax.numpy as jnp
from jax.experimental import pallas as pl
from jax.experimental.pallas import tpu as pltpu


def _self_attention_kernel(xres_ref, q_ref, k_ref, v_ref, gamma_ref, o_ref):
    """grid = (batch, q_tile, k_tile); the key-tile axis (last) is the reduction axis.

    xres_ref : (1, C,  TQ) f32  residual input tile
    q_ref    : (1, C8, TQ) bf16 projected queries (precomputed in the wrapper)
    k_ref    : (1, C8, TK) bf16 projected keys
    v_ref    : (1, C,  TK) bf16 projected values (padded columns are exactly zero)
    gamma_ref: (1, 1)      f32  in SMEM
    o_ref    : (1, C,  TQ) f32  output tile, used as the accumulator across kj
    """
    kj = pl.program_id(2)

    # ---- first key tile for this (batch, q-tile): reset the resident output/accumulator ----
    @pl.when(kj == 0)
    def _():
        o_ref[...] = jnp.zeros_like(o_ref)

    # ---- scores[i, j] = sum_c q[c, i] * k[c, j]  (TN matmul; no transpose materialized) ----
    scores = jax.lax.dot_general(
        q_ref[0], k_ref[0], (((0,), (0,)), ((), ())),
        preferred_element_type=jnp.float32)                          # (TQ, TK) f32

    # NOTE: on v6e/v7x a bf16 sigmoid (scores.astype(bf16)) halves EUP/VPU work; kept f32 here
    # so a single build matches the f32 sigmoid on v5e as well.
    attn = jax.nn.sigmoid(scores).astype(jnp.bfloat16)               # (TQ, TK) bf16

    # ---- out[c, i] += sum_j v[c, j] * attn[i, j]  (NT matmul; MXU consumes attn^T) ----
    o_ref[0] += jax.lax.dot_general(
        v_ref[0], attn, (((1,), (1,)), ((), ())),
        preferred_element_type=jnp.float32)                          # (C, TQ) f32

    # ---- last key tile: gamma residual epilogue (f32), lane-dense 128-multiple store ----
    @pl.when(kj == pl.num_programs(2) - 1)
    def _():
        o_ref[0] = gamma_ref[0, 0] * o_ref[0] + xres_ref[0]


def self_attention(x, wq, bq, wk, bk, wv, bv, gamma, *, tile_q=256, tile_k=128,
                   interpret=False):
    """x: (B, C, H, W) float32 (NCHW). Returns (B, C, H, W). Implements mode='hw'.

    tile_q / tile_k: spatial query / key tiles (multiples of 128). TQ=256, TK=128 is a good
    universal default; use tile_k=256 (and tile_q>=256) on v6e/v7x for a deeper contraction.
    On v7x, B * (N/tile_q) should be >= 2 so both TensorCores get work.
    """
    B, C, H, W = x.shape
    N = H * W
    C8 = wq.shape[0]

    x_flat = x.reshape(B, C, N).astype(jnp.float32)

    # ---- fused Q/K/V projection (1x1 conv == per-pixel linear), done ONCE outside ----
    w_all = jnp.concatenate([wq, wk, wv], axis=0).astype(jnp.bfloat16)        # (2*C8+C, C)
    b_all = jnp.concatenate([bq, bk, bv]).astype(jnp.float32)[None, :, None]  # (1, 2*C8+C, 1)
    qkv = jnp.einsum('oc,bcn->bon', w_all, x_flat.astype(jnp.bfloat16),
                     preferred_element_type=jnp.float32) + b_all              # (B, 2*C8+C, N)

    # Pad AFTER projecting: padded key/value columns are exactly zero, so zero V columns
    # contribute nothing to the output and no in-kernel mask is needed.
    n_pad = -(-N // 128) * 128
    pad = ((0, 0), (0, 0), (0, n_pad - N))
    qkv = jnp.pad(qkv, pad).astype(jnp.bfloat16)
    q = qkv[:, :C8]                                                           # (B, C8, Np)
    k = qkv[:, C8:2 * C8]                                                     # (B, C8, Np)
    v = qkv[:, 2 * C8:]                                                       # (B, C,  Np)
    x_res = jnp.pad(x_flat, pad)                                              # (B, C,  Np) f32

    def pick_tile(pref):
        t = min(pref, n_pad)
        while n_pad % t:
            t -= 128
        return t

    tq = pick_tile(tile_q)
    tk = pick_tile(tile_k)
    nq = n_pad // tq
    nk = n_pad // tk

    gamma2 = jnp.asarray(gamma, jnp.float32).reshape(1, 1)

    # Explicit scoped-VMEM budget derived from the tiles; capped at 48 MiB to leave headroom
    # under v7x's 64 MiB physical VMEM (v5e/v6e have 128 MiB, so this is also safe there).
    tile_bytes = (
        2 * C * tq * 4        # residual x blocks (double-buffered, f32)
        + 2 * C8 * tq * 2     # q blocks (bf16)
        + 2 * C8 * tk * 2     # k blocks (bf16)
        + 2 * C * tk * 2      # v blocks (bf16)
        + 2 * C * tq * 4      # output / accumulator blocks (f32)
        + 2 * tq * tk * 4     # scores / sigmoid temporaries (f32)
    )
    vmem_limit = int(min(48 * 1024 * 1024, max(16 * 1024 * 1024, 4 * tile_bytes)))

    out_flat = pl.pallas_call(
        _self_attention_kernel,
        out_shape=jax.ShapeDtypeStruct((B, C, n_pad), jnp.float32),
        grid_spec=pltpu.PrefetchScalarGridSpec(
            num_scalar_prefetch=0,
            grid=(B, nq, nk),
            in_specs=[
                pl.BlockSpec((1, C, tq), lambda b, qi, kj: (b, 0, qi)),    # residual x (f32)
                pl.BlockSpec((1, C8, tq), lambda b, qi, kj: (b, 0, qi)),   # q (bf16)
                pl.BlockSpec((1, C8, tk), lambda b, qi, kj: (b, 0, kj)),   # k (bf16)
                pl.BlockSpec((1, C, tk), lambda b, qi, kj: (b, 0, kj)),    # v (bf16)
                pl.BlockSpec(memory_space=pltpu.MemorySpace.SMEM),         # gamma scalar
            ],
            out_specs=pl.BlockSpec((1, C, tq), lambda b, qi, kj: (b, 0, qi)),
        ),
        compiler_params=pltpu.CompilerParams(
            dimension_semantics=("parallel", "parallel", "arbitrary"),
            vmem_limit_bytes=vmem_limit,
        ),
        interpret=interpret,
    )(x_res, q, k, v, gamma2)

    return out_flat[:, :, :N].reshape(B, C, H, W)


def self_attention_ref(x, wq, bq, wk, bk, wv, bv, gamma, *, mxu_dtype=None):
    """Pure-JAX reference mirroring the PyTorch forward (mode='hw').

    mxu_dtype=None reproduces the f32 PyTorch math; mxu_dtype=jnp.bfloat16 mirrors the
    kernel's bf16 MXU operands with f32 accumulation (precision-matched comparison).
    """
    B, C, H, W = x.shape
    N = H * W
    xf = x.reshape(B, C, N).astype(jnp.float32)

    def cast(a):
        return a if mxu_dtype is None else a.astype(mxu_dtype)

    xm = cast(xf)
    q = jnp.einsum('oc,bcn->bon', cast(wq), xm,
                   preferred_element_type=jnp.float32) + bq[None, :, None]    # (B, C8, N)
    k = jnp.einsum('oc,bcn->bon', cast(wk), xm,
                   preferred_element_type=jnp.float32) + bk[None, :, None]    # (B, C8, N)
    v = jnp.einsum('oc,bcn->bon', cast(wv), xm,
                   preferred_element_type=jnp.float32) + bv[None, :, None]    # (B, C,  N)
    attn = jax.nn.sigmoid(
        jnp.einsum('bci,bcj->bij', cast(q), cast(k),
                   preferred_element_type=jnp.float32))                       # (B, N, N)
    out = jnp.einsum('bcj,bij->bci', cast(v), cast(attn),
                     preferred_element_type=jnp.float32)                      # (B, C, N)
    out = jnp.asarray(gamma, jnp.float32) * out + xf
    return out.reshape(B, C, H, W)


if __name__ == "__main__":
    key = jax.random.PRNGKey(0)

    def make_params(k, C):
        C8 = max(C // 8, 1)
        kq, kbq, kk, kbk, kv, kbv = jax.random.split(k, 6)
        wq = 0.1 * jax.random.normal(kq, (C8, C), dtype=jnp.float32)
        bq = 0.1 * jax.random.normal(kbq, (C8,), dtype=jnp.float32)
        wk = 0.1 * jax.random.normal(kk, (C8, C), dtype=jnp.float32)
        bk = 0.1 * jax.random.normal(kbk, (C8,), dtype=jnp.float32)
        wv = 0.1 * jax.random.normal(kv, (C, C), dtype=jnp.float32)
        bv = 0.1 * jax.random.normal(kbv, (C,), dtype=jnp.float32)
        return wq, bq, wk, bk, wv, bv

    # gamma is nn.Parameter(torch.zeros(1)) at init; use a nonzero value so the attention
    # path is actually exercised by the checks.
    gamma = jnp.float32(0.5)

    k1, k2, kx1, kx2 = jax.random.split(key, 4)

    # Case 1: N = 256 -> exercises the (TQ=256, TK=128) grid and cross-key-tile accumulation.
    B, C, H, W = 2, 32, 16, 16
    x = jax.random.normal(kx1, (B, C, H, W), dtype=jnp.float32)
    params = make_params(k1, C)
    out = jax.block_until_ready(self_attention(x, *params, gamma))
    assert out.shape == (B, C, H, W)
    ref_match = self_attention_ref(x, *params, gamma, mxu_dtype=jnp.bfloat16)
    ref_f32 = self_attention_ref(x, *params, gamma)
    assert jnp.allclose(out, ref_match, atol=5e-3, rtol=5e-3), \
        "mismatch vs bf16-precision-matched reference"
    assert jnp.allclose(out, ref_f32, atol=1e-1, rtol=2e-2), \
        "mismatch vs f32 reference (beyond bf16 MXU tolerance)"

    # Case 2: N = 100 (not a multiple of 128) -> exercises the zero-padded key/value path.
    B2, C2, H2, W2 = 1, 16, 10, 10
    x2 = jax.random.normal(kx2, (B2, C2, H2, W2), dtype=jnp.float32)
    params2 = make_params(k2, C2)
    out2 = jax.block_until_ready(self_attention(x2, *params2, gamma))
    assert out2.shape == (B2, C2, H2, W2)
    ref2_match = self_attention_ref(x2, *params2, gamma, mxu_dtype=jnp.bfloat16)
    ref2_f32 = self_attention_ref(x2, *params2, gamma)
    assert jnp.allclose(out2, ref2_match, atol=5e-3, rtol=5e-3), \
        "mismatch vs bf16-precision-matched reference (padded case)"
    assert jnp.allclose(out2, ref2_f32, atol=1e-1, rtol=2e-2), \
        "mismatch vs f32 reference (padded case)"

    print("KERNEL_OK")
</pallas_src>

<mosaic_0001>
module attributes {stable_mosaic.version = 11 : i64} {
  func.func @_self_attention_kernel(%arg0: i32, %arg1: i32, %arg2: i32, %arg3: memref<1x32x256xf32, #tpu.memory_space<vmem>>, %arg4: memref<1x4x256xbf16, #tpu.memory_space<vmem>>, %arg5: memref<1x4x128xbf16, #tpu.memory_space<vmem>>, %arg6: memref<1x32x128xbf16, #tpu.memory_space<vmem>>, %arg7: memref<1x1xf32, #tpu.memory_space<smem>>, %arg8: memref<1x32x256xf32, #tpu.memory_space<vmem>>) attributes {dimension_semantics = [#tpu.dimension_semantics<parallel>, #tpu.dimension_semantics<parallel>, #tpu.dimension_semantics<arbitrary>], iteration_bounds = array<i64: 2, 1, 2>, scalar_prefetch = 0 : i64, scratch_operands = 0 : i64, tpu.core_type = #tpu.core_type<tc>, window_params = [{transform_indices = @transform_0, window_bounds = array<i64: 1, 32, 256>}, {transform_indices = @transform_1, window_bounds = array<i64: 1, 4, 256>}, {transform_indices = @transform_2, window_bounds = array<i64: 1, 4, 128>}, {transform_indices = @transform_3, window_bounds = array<i64: 1, 32, 128>}, {transform_indices = @transform_4, window_bounds = array<i64: 1, 1>}, {transform_indices = @transform_5, window_bounds = array<i64: 1, 32, 256>}]} {
    %c0_i32 = arith.constant 0 : i32
    %0 = arith.cmpi eq, %arg2, %c0_i32 : i32
    %1 = arith.extui %0 : i1 to i32
    %c0_i32_0 = arith.constant 0 : i32
    %2 = arith.cmpi ne, %1, %c0_i32_0 : i32
    scf.if %2 {
      %cst_18 = arith.constant 0.000000e+00 : f32
      %26 = vector.broadcast %cst_18 : f32 to vector<1x32x256xf32>
      %c0_19 = arith.constant 0 : index
      %c0_20 = arith.constant 0 : index
      %c0_21 = arith.constant 0 : index
      %27 = vector.load %arg8[%c0_19, %c0_20, %c0_21] : memref<1x32x256xf32, #tpu.memory_space<vmem>>, vector<1x32x256xf32>
      tpu.vector_store %arg8[%c0_19, %c0_20, %c0_21], %26 {strides = array<i32>} : memref<1x32x256xf32, #tpu.memory_space<vmem>>, vector<1x32x256xf32>,
    } else {
    }
    %c0 = arith.constant 0 : index
    %c0_1 = arith.constant 0 : index
    %c0_2 = arith.constant 0 : index
    %3 = vector.load %arg4[%c0, %c0_1, %c0_2] : memref<1x4x256xbf16, #tpu.memory_space<vmem>>, vector<1x4x256xbf16>
    %4 = vector.shape_cast %3 : vector<1x4x256xbf16> to vector<4x256xbf16>
    %c0_3 = arith.constant 0 : index
    %c0_4 = arith.constant 0 : index
    %c0_5 = arith.constant 0 : index
    %5 = vector.load %arg5[%c0_3, %c0_4, %c0_5] : memref<1x4x128xbf16, #tpu.memory_space<vmem>>, vector<1x4x128xbf16>
    %6 = vector.shape_cast %5 : vector<1x4x128xbf16> to vector<4x128xbf16>
    %cst = arith.constant dense<0.000000e+00> : vector<256x128xf32>
    %7 = tpu.matmul %4, %6, %cst {dimension_numbers = #tpu.dot_dimension_numbers<[0], [0], [1], [1], [0, 1, 1, 1], [], []>} : vector<4x256xbf16>, vector<4x128xbf16>, vector<256x128xf32> -> vector<256x128xf32>
    %8 = arith.negf %7 : vector<256x128xf32>
    %9 = math.exp %8 : vector<256x128xf32>
    %cst_6 = arith.constant 1.000000e+00 : f32
    %10 = vector.broadcast %cst_6 : f32 to vector<256x128xf32>
    %11 = arith.addf %10, %9 : vector<256x128xf32>
    %12 = arith.divf %10, %11 : vector<256x128xf32>
    %13 = arith.truncf %12 : vector<256x128xf32> to vector<256x128xbf16>
    %c0_7 = arith.constant 0 : index
    %c0_8 = arith.constant 0 : index
    %c0_9 = arith.constant 0 : index
    %14 = vector.load %arg8[%c0_7, %c0_8, %c0_9] : memref<1x32x256xf32, #tpu.memory_space<vmem>>, vector<1x32x256xf32>
    %15 = vector.shape_cast %14 : vector<1x32x256xf32> to vector<32x256xf32>
    %c0_10 = arith.constant 0 : index
    %c0_11 = arith.constant 0 : index
    %c0_12 = arith.constant 0 : index
    %16 = vector.load %arg6[%c0_10, %c0_11, %c0_12] : memref<1x32x128xbf16, #tpu.memory_space<vmem>>, vector<1x32x128xbf16>
    %17 = vector.shape_cast %16 : vector<1x32x128xbf16> to vector<32x128xbf16>
    %cst_13 = arith.constant dense<0.000000e+00> : vector<32x256xf32>
    %18 = tpu.matmul %17, %13, %cst_13 {dimension_numbers = #tpu.dot_dimension_numbers<[1], [1], [0], [0], [0, 0, 1, 0], [], []>} : vector<32x128xbf16>, vector<256x128xbf16>, vector<32x256xf32> -> vector<32x256xf32>
    %19 = arith.addf %15, %18 : vector<32x256xf32>
    %c0_14 = arith.constant 0 : index
    %c0_15 = arith.constant 0 : index
    %c0_16 = arith.constant 0 : index
    %20 = vector.load %arg8[%c0_14, %c0_15, %c0_16] : memref<1x32x256xf32, #tpu.memory_space<vmem>>, vector<1x32x256xf32>
    %21 = vector.shape_cast %20 : vector<1x32x256xf32> to vector<32x256xf32>
    %22 = vector.shape_cast %19 : vector<32x256xf32> to vector<1x32x256xf32>
    tpu.vector_store %arg8[%c0_14, %c0_15, %c0_16], %22 {strides = array<i32>} : memref<1x32x256xf32, #tpu.memory_space<vmem>>, vector<1x32x256xf32>,
    %c1_i32 = arith.constant 1 : i32
    %23 = arith.cmpi eq, %arg2, %c1_i32 : i32
    %24 = arith.extui %23 : i1 to i32
    %c0_i32_17 = arith.constant 0 : i32
    %25 = arith.cmpi ne, %24, %c0_i32_17 : i32
    scf.if %25 {
      %c0_18 = arith.constant 0 : index
      %c0_19 = arith.constant 0 : index
      %26 = memref.load %arg7[%c0_18, %c0_19] : memref<1x1xf32, #tpu.memory_space<smem>>
      %c0_20 = arith.constant 0 : index
      %c0_21 = arith.constant 0 : index
      %c0_22 = arith.constant 0 : index
      %27 = vector.load %arg8[%c0_20, %c0_21, %c0_22] : memref<1x32x256xf32, #tpu.memory_space<vmem>>, vector<1x32x256xf32>
      %28 = vector.shape_cast %27 : vector<1x32x256xf32> to vector<32x256xf32>
      %29 = vector.broadcast %26 : f32 to vector<32x256xf32>
      %30 = arith.mulf %29, %28 : vector<32x256xf32>
      %c0_23 = arith.constant 0 : index
      %c0_24 = arith.constant 0 : index
      %c0_25 = arith.constant 0 : index
      %31 = vector.load %arg3[%c0_23, %c0_24, %c0_25] : memref<1x32x256xf32, #tpu.memory_space<vmem>>, vector<1x32x256xf32>
      %32 = vector.shape_cast %31 : vector<1x32x256xf32> to vector<32x256xf32>
      %33 = arith.addf %30, %32 : vector<32x256xf32>
      %c0_26 = arith.constant 0 : index
      %c0_27 = arith.constant 0 : index
      %c0_28 = arith.constant 0 : index
      %34 = vector.load %arg8[%c0_26, %c0_27, %c0_28] : memref<1x32x256xf32, #tpu.memory_space<vmem>>, vector<1x32x256xf32>
      %35 = vector.shape_cast %34 : vector<1x32x256xf32> to vector<32x256xf32>
      %36 = vector.shape_cast %33 : vector<32x256xf32> to vector<1x32x256xf32>
      tpu.vector_store %arg8[%c0_26, %c0_27, %c0_28], %36 {strides = array<i32>} : memref<1x32x256xf32, #tpu.memory_space<vmem>>, vector<1x32x256xf32>,
    } else {
    }
    return
  }
  func.func @transform_0(%arg0: i32, %arg1: i32, %arg2: i32) -> (i32, i32, i32) {
    %c0_i32 = arith.constant 0 : i32
    %c0_i32_0 = arith.constant 0 : i32
    return %arg0, %c0_i32, %arg1 : i32, i32, i32
  }
  func.func @transform_1(%arg0: i32, %arg1: i32, %arg2: i32) -> (i32, i32, i32) {
    %c0_i32 = arith.constant 0 : i32
    %c0_i32_0 = arith.constant 0 : i32
    return %arg0, %c0_i32, %arg1 : i32, i32, i32
  }
  func.func @transform_2(%arg0: i32, %arg1: i32, %arg2: i32) -> (i32, i32, i32) {
    %c0_i32 = arith.constant 0 : i32
    %c0_i32_0 = arith.constant 0 : i32
    return %arg0, %c0_i32, %arg2 : i32, i32, i32
  }
  func.func @transform_3(%arg0: i32, %arg1: i32, %arg2: i32) -> (i32, i32, i32) {
    %c0_i32 = arith.constant 0 : i32
    %c0_i32_0 = arith.constant 0 : i32
    return %arg0, %c0_i32, %arg2 : i32, i32, i32
  }
  func.func @transform_4(%arg0: i32, %arg1: i32, %arg2: i32) -> (i32, i32) {
    %c0_i32 = arith.constant 0 : i32
    %c0_i32_0 = arith.constant 0 : i32
    %c0_i32_1 = arith.constant 0 : i32
    return %c0_i32, %c0_i32_0 : i32, i32
  }
  func.func @transform_5(%arg0: i32, %arg1: i32, %arg2: i32) -> (i32, i32, i32) {
    %c0_i32 = arith.constant 0 : i32
    %c0_i32_0 = arith.constant 0 : i32
    return %arg0, %c0_i32, %arg1 : i32, i32, i32
  }
}

</mosaic_0001>

<llo_original>
// kernel: tpu_custom_call.1
$region0: #{tpu_custom_call.1}
  #allocation0 [shape = 'u32[]', space=smem, size = 0x4, offset = 0x4, fixed_abs, tag = 'smem constant byte address 0x4 - core index']
  #allocation1 [shape = 'u32[144,128]{1,0:T(1,128)}', space=vmem, size = 0x12000, scoped, tag = 'internal scratch']
  #allocation2 [shape = 'f32[1,1]{1,0:T(1,128)S(6)}', space=smem, size = 0x200, scoped, tag = 'scoped memory for tpu_custom_call.1']
  %s0 = inlined_call_operand.hbm [shape: f32[2,32,256], index: 0, kind: input, shape index: {}]
  %s1 = inlined_call_operand.hbm [shape: bf16[2,4,256], index: 1, kind: input, shape index: {}]
  %s2 = inlined_call_operand.vmem [shape: bf16[2,4,256], index: 2, kind: input, shape index: {}]
  %s3 = inlined_call_operand.hbm [shape: bf16[2,32,256], index: 3, kind: input, shape index: {}]
  %s4 = inlined_call_operand.<no memory space> [shape: f32[1,1], index: 4, kind: input, shape index: {}]
  %s5 = inlined_call_operand.hbm [shape: f32[2,32,256], index: 5, kind: output, shape index: {}]
  %s6 = sld [smem:[#allocation0]]
  $region73: #{tpu_custom_call.1} parent=0
    _
  %s8 = ssub.s32 1, %s6
  %s9 = scalar_select 0, %s8, %s6
  %10 = sst [smem:[#allocation2]] %s4
  $region1: #{tpu_custom_call.1} parent=0
    #allocation3 [shape = 'u8[65536]{0}', space=vmem, size = 0x10000, scoped, tag = 'input window, operand 0']
    #allocation4 [shape = 's32[2]{0}', space=sflag, size = 0x8, scoped, tag = 'scoped memory for tpu_custom_call.1']
    #allocation5 [shape = 's32[2]{0}', space=sflag, size = 0x8, scoped, tag = 'scoped memory for tpu_custom_call.1']
    #allocation6 [shape = 'u8[4096]{0}', space=vmem, size = 0x1000, scoped, tag = 'input window, operand 1']
    #allocation7 [shape = 's32[2]{0}', space=sflag, size = 0x8, scoped, tag = 'scoped memory for tpu_custom_call.1']
    #allocation8 [shape = 'u8[16384]{0}', space=vmem, size = 0x4000, scoped, tag = 'input window, operand 3']
    #allocation9 [shape = 'u8[65536]{0}', space=vmem, size = 0x10000, scoped, tag = 'output window, operand 0']
    %11 = vsyncpa [#allocation4], 0
    %s12 = scalar_lea.sflag [#allocation4], 1
    %13 = vsyncpa %s12, 0
    %14 = vsyncpa [#allocation7], 0
    %s15 = scalar_lea.sflag [#allocation7], 1
    %16 = vsyncpa %s15, 0
    %17 = vsyncpa [#allocation5], 0
    %s18 = scalar_lea.sflag [#allocation5], 1
    %19 = vsyncpa %s18, 0
    loop: start=0, step=1, limit=6
    $region2: #{tpu_custom_call.1} parent=1 // loop_pre_header
      _
    $region3: #{tpu_custom_call.1} parent=1 // loop_header
      %s21 = sphi 0, %s25
      %p22 = scmp.ge.s32.totalorder %s21, 6
      %s28 = sphi 0, %s47
      %s29 = sphi 0, %s43
      %s30 = sphi 0, %s39
      %s31 = sphi 0, %s28
      %s32 = sphi 0, %s29
      %s33 = sphi 0, %s30
      %s34 = sphi 0, %s31
      %s35 = sphi 0, %s32
      %s36 = sphi 0, %s33
      %s52 = sphi 0, %s54
      %s55 = sphi 0, %s52
      %s56 = sphi 0, %s55
      %s72 = sphi 0, %s56
      %s80 = sphi 0, %s82
      %s83 = sphi 0, %s80
      %s84 = sphi 0, %s83
      %s100 = sphi 0, %s84
      %s108 = sphi 0, %s110
      %s111 = sphi 0, %s108
      %s112 = sphi 0, %s111
      %s128 = sphi 0, %s112
      %s136 = sphi 0, %s138
      %s139 = sphi 0, %s136
      %s140 = sphi 0, %s139
      %s156 = sphi 0, %s140
      %s160 = sphi 0, %s160
      %s162 = sphi 0, %s160
      %s163 = sphi 0, %s162
      %s177 = sphi 0, %s163
      %s185 = sphi 0, %s187
      %s188 = sphi 0, %s185
      %s189 = sphi 0, %s188
      %s205 = sphi 0, %s189
    $region4: #{tpu_custom_call.1} parent=1 // loop_header_branch
      %24 = sbr.rel (%p22) target = $region8
    $region5: #{tpu_custom_call.1} parent=1 // loop_body
      %s26 = ssub.s32 %s21, 1
      %s27 = ssub.s32 %s21, 2
      %s37 = sadd.s32 1, %s30
      %p38 = scmp.ge.s32.totalorder %s37, 2
      %s39 = scalar_select %p38, 0, %s37
      %s40 = sadd.s32 1, %s29
      %s41 = scalar_select %p38, %s40, %s29
      %p42 = scmp.ge.s32.totalorder %s41, 1
      %s43 = scalar_select %p42, 0, %s41
      %s44 = sadd.s32 1, %s28
      %s45 = scalar_select %p42, %s44, %s28
      %p46 = scmp.ge.s32.totalorder %s45, 2
      %s47 = scalar_select %p46, 0, %s45
      %s48 = ssub.s32 %s28, %s47
      %s49 = ssub.s32 %s29, %s43
      %s50 = sor.u32 %s48, %s49
      %p51 = scmp.eq.s32.totalorder %s50, 0
      %s53 = sadd.s32 %s52, 1
      %s54 = scalar_select %p51, %s52, %s53
      %p57 = pneg %p51
      %p58 = scmp.eq.s32.totalorder %s21, 3
      %p59 = por %p57, %p58
      %p60 = scmp.ne.s32.totalorder %s52, %s55
      %p61 = scmp.eq.s32.totalorder %s21, 0
      %p62 = por %p60, %p61
      %p63 = scmp.ne.s32.totalorder %s52, %s55
      %p64 = scmp.eq.s32.totalorder %s26, 3
      %p65 = por %p63, %p64
      %p66 = scmp.ne.s32.totalorder %s55, %s56
      %p67 = scmp.eq.s32.totalorder %s26, 0
      %p68 = por %p66, %p67
      %p69 = scmp.ne.s32.totalorder %s55, %s56
      %p70 = scmp.eq.s32.totalorder %s27, 3
      %p71 = por %p69, %p70
      %p73 = scmp.ne.s32.totalorder %s56, %s72
      %p74 = scmp.eq.s32.totalorder %s27, 0
      %p75 = por %p73, %p74
      %s76 = ssub.s32 %s28, %s47
      %s77 = ssub.s32 %s29, %s43
      %s78 = sor.u32 %s76, %s77
      %p79 = scmp.eq.s32.totalorder %s78, 0
      %s81 = sadd.s32 %s80, 1
      %s82 = scalar_select %p79, %s80, %s81
      %p85 = pneg %p79
      %p86 = scmp.eq.s32.totalorder %s21, 3
      %p87 = por %p85, %p86
      %p88 = scmp.ne.s32.totalorder %s80, %s83
      %p89 = scmp.eq.s32.totalorder %s21, 0
      %p90 = por %p88, %p89
      %p91 = scmp.ne.s32.totalorder %s80, %s83
      %p92 = scmp.eq.s32.totalorder %s26, 3
      %p93 = por %p91, %p92
      %p94 = scmp.ne.s32.totalorder %s83, %s84
      %p95 = scmp.eq.s32.totalorder %s26, 0
      %p96 = por %p94, %p95
      %p97 = scmp.ne.s32.totalorder %s83, %s84
      %p98 = scmp.eq.s32.totalorder %s27, 3
      %p99 = por %p97, %p98
      %p101 = scmp.ne.s32.totalorder %s84, %s100
      %p102 = scmp.eq.s32.totalorder %s27, 0
      %p103 = por %p101, %p102
      %s104 = ssub.s32 %s28, %s47
      %s105 = ssub.s32 %s30, %s39
      %s106 = sor.u32 %s104, %s105
      %p107 = scmp.eq.s32.totalorder %s106, 0
      %s109 = sadd.s32 %s108, 1
      %s110 = scalar_select %p107, %s108, %s109
      %p113 = pneg %p107
      %p114 = scmp.eq.s32.totalorder %s21, 3
      %p115 = por %p113, %p114
      %p116 = scmp.ne.s32.totalorder %s108, %s111
      %p117 = scmp.eq.s32.totalorder %s21, 0
      %p118 = por %p116, %p117
      %p119 = scmp.ne.s32.totalorder %s108, %s111
      %p120 = scmp.eq.s32.totalorder %s26, 3
      %p121 = por %p119, %p120
      %p122 = scmp.ne.s32.totalorder %s111, %s112
      %p123 = scmp.eq.s32.totalorder %s26, 0
      %p124 = por %p122, %p123
      %p125 = scmp.ne.s32.totalorder %s111, %s112
      %p126 = scmp.eq.s32.totalorder %s27, 3
      %p127 = por %p125, %p126
      %p129 = scmp.ne.s32.totalorder %s112, %s128
      %p130 = scmp.eq.s32.totalorder %s27, 0
      %p131 = por %p129, %p130
      %s132 = ssub.s32 %s28, %s47
      %s133 = ssub.s32 %s30, %s39
      %s134 = sor.u32 %s132, %s133
      %p135 = scmp.eq.s32.totalorder %s134, 0
      %s137 = sadd.s32 %s136, 1
      %s138 = scalar_select %p135, %s136, %s137
      %p141 = pneg %p135
      %p142 = scmp.eq.s32.totalorder %s21, 3
      %p143 = por %p141, %p142
      %p144 = scmp.ne.s32.totalorder %s136, %s139
      %p145 = scmp.eq.s32.totalorder %s21, 0
      %p146 = por %p144, %p145
      %p147 = scmp.ne.s32.totalorder %s136, %s139
      %p148 = scmp.eq.s32.totalorder %s26, 3
      %p149 = por %p147, %p148
      %p150 = scmp.ne.s32.totalorder %s139, %s140
      %p151 = scmp.eq.s32.totalorder %s26, 0
      %p152 = por %p150, %p151
      %p153 = scmp.ne.s32.totalorder %s139, %s140
      %p154 = scmp.eq.s32.totalorder %s27, 3
      %p155 = por %p153, %p154
      %p157 = scmp.ne.s32.totalorder %s140, %s156
      %p158 = scmp.eq.s32.totalorder %s27, 0
      %p159 = por %p157, %p158
      %s161 = sadd.s32 %s160, 1
      %p164 = scmp.eq.s32.totalorder %s21, 3
      %p165 = scmp.ne.s32.totalorder %s160, %s162
      %p166 = scmp.eq.s32.totalorder %s21, 0
      %p167 = por %p165, %p166
      %p168 = scmp.ne.s32.totalorder %s160, %s162
      %p169 = scmp.eq.s32.totalorder %s26, 3
      %p170 = por %p168, %p169
      %p171 = scmp.ne.s32.totalorder %s162, %s163
      %p172 = scmp.eq.s32.totalorder %s26, 0
      %p173 = por %p171, %p172
      %p174 = scmp.ne.s32.totalorder %s162, %s163
      %p175 = scmp.eq.s32.totalorder %s27, 3
      %p176 = por %p174, %p175
      %p178 = scmp.ne.s32.totalorder %s163, %s177
      %p179 = scmp.eq.s32.totalorder %s27, 0
      %p180 = por %p178, %p179
      %s181 = ssub.s32 %s28, %s47
      %s182 = ssub.s32 %s29, %s43
      %s183 = sor.u32 %s181, %s182
      %p184 = scmp.eq.s32.totalorder %s183, 0
      %s186 = sadd.s32 %s185, 1
      %s187 = scalar_select %p184, %s185, %s186
      %p190 = pneg %p184
      %p191 = scmp.eq.s32.totalorder %s21, 3
      %p192 = por %p190, %p191
      %p193 = scmp.ne.s32.totalorder %s185, %s188
      %p194 = scmp.eq.s32.totalorder %s21, 0
      %p195 = por %p193, %p194
      %p196 = scmp.ne.s32.totalorder %s185, %s188
      %p197 = scmp.eq.s32.totalorder %s26, 3
      %p198 = por %p196, %p197
      %p199 = scmp.ne.s32.totalorder %s188, %s189
      %p200 = scmp.eq.s32.totalorder %s26, 0
      %p201 = por %p199, %p200
      %p202 = scmp.ne.s32.totalorder %s188, %s189
      %p203 = scmp.eq.s32.totalorder %s27, 3
      %p204 = por %p202, %p203
      %p206 = scmp.ne.s32.totalorder %s189, %s205
      %p207 = scmp.eq.s32.totalorder %s27, 0
      %p208 = por %p206, %p207
      %p209 = scmp.le.s32.totalorder 1, %s21
      %p210 = scmp.lt.s32.totalorder %s21, 5
      %p211 = pnand %p209, %p210
      %p212 = pneg %p211
      // Predicated region
      $region9: #{tpu_custom_call.1} parent=5 // pred_check
        _
      $region10: #{tpu_custom_call.1} parent=5 // pred_check_branch
        %214 = sbr.rel (%p211) target = $region12
      $region11: #{tpu_custom_call.1} parent=5 // pred_region
        %s215 = ssub.s32 %s21, 1
        // Predicated region
        $region13: #{tpu_custom_call.1} parent=11 // pred_check
          %p216 = pneg %p173
        $region14: #{tpu_custom_call.1} parent=11 // pred_check_branch
          %218 = sbr.rel (%p216) target = $region16
        $region15: #{tpu_custom_call.1} parent=11 // pred_region
          _
        $region16: #{tpu_custom_call.1} parent=11 // pred_fallthru
          _
      $region12: #{tpu_custom_call.1} parent=5 // pred_fallthru
        _
      %p219 = scmp.lt.s32.totalorder %s21, 4
      // Predicated region
      $region17: #{tpu_custom_call.1} parent=5 // pred_check
        %p220 = pneg %p219
      $region18: #{tpu_custom_call.1} parent=5 // pred_check_branch
        %222 = sbr.rel (%p220) target = $region20
      $region19: #{tpu_custom_call.1} parent=5 // pred_region
        // Predicated region
        $region21: #{tpu_custom_call.1} parent=19 // pred_check
          %p223 = pneg %p62
        $region22: #{tpu_custom_call.1} parent=19 // pred_check_branch
          %225 = sbr.rel (%p223) target = $region24
        $region23: #{tpu_custom_call.1} parent=19 // pred_region
          %s226 = sand.u32 %s52, 1
          %s227 = scalar_lea.sflag [#allocation4], %s226
          %s228 = sand.u32 %s52, 1
          %s229 = smul.addr %s228, 64
          %s230 = scalar_lea.vmem [#allocation3], %s229
          %s231 = smul.u32 2, %s29
          %s233 = ssub.s32 1024, 1024
          %234 = vsyncadd %s227, %s233
          %s235 = smul.addr %s28, 8
          %s236 = sadd.s32 %s231, %s235
          %s237 = smul.addr %s236, 128
          %s238 = scalar_lea.hbm %s0, %s237
          %s239 = sshll.u32 %s230, 4
          %s240 = int_to_ptr.vmem [resolvable:$true] %s239
          %245 = dma.hbm_to_vmem [thread:$0]  %s238, 1024, %s240, %s227, 256, 256, 16
        $region24: #{tpu_custom_call.1} parent=19 // pred_fallthru
          _
        // Predicated region
        $region25: #{tpu_custom_call.1} parent=19 // pred_check
          %p246 = pneg %p90
        $region26: #{tpu_custom_call.1} parent=19 // pred_check_branch
          %248 = sbr.rel (%p246) target = $region28
        $region27: #{tpu_custom_call.1} parent=19 // pred_region
          %s249 = sand.u32 %s21, 1
          %s250 = scalar_lea.sflag [#allocation7], %s249
          %s251 = sand.u32 %s80, 1
          %s252 = smul.addr %s251, 4
          %s253 = scalar_lea.vmem [#allocation6], %s252
          %s254 = smul.u32 2, %s29
          %s256 = ssub.s32 64, 64
          %257 = vsyncadd %s250, %s256
          %s258 = smul.addr %s28, 2
          %s259 = sadd.s32 %s254, %s258
          %s260 = smul.addr %s259, 32
          %s261 = scalar_lea.hbm %s1, %s260
          %s263 = sshll.u32 %s253, 4
          %s264 = int_to_ptr.vmem [resolvable:$true] %s263
          %266 = dma.hbm_to_vmem [thread:$0]  %s261, 64, %s264, %s250
        $region28: #{tpu_custom_call.1} parent=19 // pred_fallthru
          _
        // Predicated region
        $region29: #{tpu_custom_call.1} parent=19 // pred_check
          %p267 = pneg %p118
        $region30: #{tpu_custom_call.1} parent=19 // pred_check_branch
          %269 = sbr.rel (%p267) target = $region32
        $region31: #{tpu_custom_call.1} parent=19 // pred_region
          %p270 = scmp.lt.s32.totalorder %s28, 1
          %s271 = scalar_select %p270, %s28, 1
          %p272 = scmp.lt.s32.totalorder %s30, 1
          %s273 = scalar_select %p272, %s30, 1
          %s274 = smul.addr %s271, 2
          %s275 = sadd.s32 %s273, %s274
          %s276 = smul.addr %s275, 2
          %s277 = scalar_lea.vmem %s2, %s276
        $region32: #{tpu_custom_call.1} parent=19 // pred_fallthru
          _
        // Predicated region
        $region33: #{tpu_custom_call.1} parent=19 // pred_check
          %p278 = pneg %p146
        $region34: #{tpu_custom_call.1} parent=19 // pred_check_branch
          %280 = sbr.rel (%p278) target = $region36
        $region35: #{tpu_custom_call.1} parent=19 // pred_region
          %s281 = sand.u32 %s21, 1
          %s282 = scalar_lea.sflag [#allocation7], %s281
          %s283 = sand.u32 %s136, 1
          %s284 = smul.addr %s283, 16
          %s285 = scalar_lea.vmem [#allocation8], %s284
          %s287 = ssub.s32 256, 256
          %288 = vsyncadd %s282, %s287
          %s289 = smul.addr %s28, 8
          %s290 = sadd.s32 %s30, %s289
          %s291 = smul.addr %s290, 64
          %s292 = scalar_lea.hbm %s3, %s291
          %s293 = sshll.u32 %s285, 4
          %s294 = int_to_ptr.vmem [resolvable:$true] %s293
          %299 = dma.hbm_to_vmem [thread:$0]  %s292, 256, %s294, %s282, 128, 64, 4
        $region36: #{tpu_custom_call.1} parent=19 // pred_fallthru
          _
      $region20: #{tpu_custom_call.1} parent=5 // pred_fallthru
        _
      %p300 = scmp.le.s32.totalorder 1, %s21
      %p301 = scmp.lt.s32.totalorder %s21, 5
      %p302 = pnand %p300, %p301
      %p303 = pneg %p302
      // Predicated region
      $region37: #{tpu_custom_call.1} parent=5 // pred_check
        _
      $region38: #{tpu_custom_call.1} parent=5 // pred_check_branch
        %305 = sbr.rel (%p302) target = $region40
      $region39: #{tpu_custom_call.1} parent=5 // pred_region
        %s306 = ssub.s32 %s21, 1
        %s307 = sand.u32 %s55, 1
        %s308 = scalar_lea.sflag [#allocation4], %s307
        %s309 = sand.u32 %s55, 1
        %s310 = smul.addr %s309, 64
        %s311 = scalar_lea.vmem [#allocation3], %s310
        // Predicated region
        $region41: #{tpu_custom_call.1} parent=39 // pred_check
          %p312 = pneg %p68
        $region42: #{tpu_custom_call.1} parent=39 // pred_check_branch
          %314 = sbr.rel (%p312) target = $region44
        $region43: #{tpu_custom_call.1} parent=39 // pred_region
          %315 = dma.done %s308, 1024
        $region44: #{tpu_custom_call.1} parent=39 // pred_fallthru
          _
        %s316 = sand.u32 %s26, 1
        %s317 = scalar_lea.sflag [#allocation7], %s316
        %s318 = sand.u32 %s83, 1
        %s319 = smul.addr %s318, 4
        %s320 = scalar_lea.vmem [#allocation6], %s319
        // Predicated region
        $region45: #{tpu_custom_call.1} parent=39 // pred_check
          %p321 = pneg %p96
        $region46: #{tpu_custom_call.1} parent=39 // pred_check_branch
          %323 = sbr.rel (%p321) target = $region48
        $region47: #{tpu_custom_call.1} parent=39 // pred_region
          %324 = dma.done %s317, 64
        $region48: #{tpu_custom_call.1} parent=39 // pred_fallthru
          _
        %s325 = sand.u32 %s26, 1
        %s326 = scalar_lea.sflag [#allocation7], %s325
        %s327 = sand.u32 %s139, 1
        %s328 = smul.addr %s327, 16
        %s329 = scalar_lea.vmem [#allocation8], %s328
        // Predicated region
        $region49: #{tpu_custom_call.1} parent=39 // pred_check
          %p330 = pneg %p152
        $region50: #{tpu_custom_call.1} parent=39 // pred_check_branch
          %332 = sbr.rel (%p330) target = $region52
        $region51: #{tpu_custom_call.1} parent=39 // pred_region
          %333 = dma.done %s326, 256
        $region52: #{tpu_custom_call.1} parent=39 // pred_fallthru
          _
        %s334 = sand.u32 %s55, 1
        %s335 = scalar_lea.sflag [#allocation4], %s334
        %s336 = sand.u32 %s55, 1
        %s337 = smul.addr %s336, 64
        %s338 = scalar_lea.vmem [#allocation3], %s337
        %p339 = pneg %p68
        %p340 = pneg %p65
        %s341 = sand.u32 %s26, 1
        %s342 = scalar_lea.sflag [#allocation7], %s341
        %s343 = sand.u32 %s83, 1
        %s344 = smul.addr %s343, 4
        %s345 = scalar_lea.vmem [#allocation6], %s344
        %p346 = pneg %p96
        %p347 = pneg %p93
        %p348 = scmp.lt.s32.totalorder %s31, 1
        %s349 = scalar_select %p348, %s31, 1
        %p350 = scmp.lt.s32.totalorder %s33, 1
        %s351 = scalar_select %p350, %s33, 1
        %s352 = smul.addr %s349, 2
        %s353 = sadd.s32 %s351, %s352
        %s354 = smul.addr %s353, 2
        %s355 = scalar_lea.vmem %s2, %s354
        %p356 = pneg %p124
        %p357 = pneg %p121
        %s358 = sand.u32 %s26, 1
        %s359 = scalar_lea.sflag [#allocation7], %s358
        %s360 = sand.u32 %s139, 1
        %s361 = smul.addr %s360, 16
        %s362 = scalar_lea.vmem [#allocation8], %s361
        %p363 = pneg %p152
        %p364 = pneg %p149
        %p365 = pneg %p173
        %p366 = pneg %p170
        %p367 = pneg %p201
        %p368 = pneg %p198
        %s369 = sand.u32 %s188, 1
        %s370 = scalar_lea.sflag [#allocation5], %s369
        %s371 = sand.u32 %s188, 1
        %s372 = smul.addr %s371, 64
        %s373 = scalar_lea.vmem [#allocation9], %s372
        %s374 = smul.u32 2, %s32
        %s375 = smul.u32 2, %s32
        %p376 = scmp.lt.s32.totalorder %s31, 1
        %s377 = scalar_select %p376, %s31, 1
        %p378 = scmp.lt.s32.totalorder %s33, 1
        %s379 = scalar_select %p378, %s33, 1
        %s380 = smul.addr %s377, 2
        %s381 = sadd.s32 %s379, %s380
        %s382 = smul.addr %s381, 2
        %s383 = scalar_lea.vmem %s2, %s382
        %s384 = smul.u32 2, %s32
        %p386 = scmp.eq.s32.totalorder %s33, 0
        // Predicated region
        $region53: #{tpu_custom_call.1} parent=39 // pred_check
          %p387 = pneg %p386
        $region54: #{tpu_custom_call.1} parent=39 // pred_check_branch
          %389 = sbr.rel (%p387) target = $region56
        $region55: #{tpu_custom_call.1} parent=39 // pred_region
          %390 = vst [vmem:[%s373] sm:$0xff] 0.0
          %391 = vst [vmem:[%s373 + $0x8] sm:$0xff] 0.0
          %392 = vst [vmem:[%s373 + $0x10] sm:$0xff] 0.0
          %393 = vst [vmem:[%s373 + $0x18] sm:$0xff] 0.0
          %394 = vst [vmem:[%s373 + $0x20] sm:$0xff] 0.0
          %395 = vst [vmem:[%s373 + $0x28] sm:$0xff] 0.0
          %396 = vst [vmem:[%s373 + $0x30] sm:$0xff] 0.0
          %397 = vst [vmem:[%s373 + $0x38] sm:$0xff] 0.0
        $region56: #{tpu_custom_call.1} parent=39 // pred_fallthru
          _
        %v398 = vld [vmem:[%s320] sm:$0xf]
        %v399 = vld [vmem:[%s383] sm:$0x3]
        %v402 = vunpack.c.l.s4 1983009808
        %v403 = vunpack.c.0.s8 %v402
        %v404 = vlaneseq
        %v405 = vshrl.u32 %v404, 7
        %v406 = vsub.s32 %v403, %v405
        %v407 = vrot.slane %v398, %v406
        %v408 = vcombine.high %v407, %v407
        %411 = vxpose.xlu0.c.b16.start [1/8] %v407, 128
        %412 = vxpose.xlu0.c.b16.cont [2/8] 0, 128
        %413 = vxpose.xlu0.c.b16.cont [3/8] 0, 128
        %414 = vxpose.xlu0.c.b16.cont [4/8] 0, 128
        %415 = vxpose.xlu0.c.b16.cont [5/8] 0, 128
        %416 = vxpose.xlu0.c.b16.cont [6/8] 0, 128
        %417 = vxpose.xlu0.c.b16.cont [7/8] 0, 128
        %418 = vxpose.xlu0.c.b16.end [8/8] 0, 128
        %v419 = vpop.trf.xlu0
        %v420 = vpop.trf.xlu0
        %v421 = vpop.trf.xlu0
        %v422 = vpop.trf.xlu0
        %v423 = vpop.trf.xlu0
        %v424 = vpop.trf.xlu0
        %v425 = vpop.trf.xlu0
        %v426 = vpop.trf.xlu0
        %427 = vxpose.xlu0.c.b16.start [1/8] %v408, 128
        %428 = vxpose.xlu0.c.b16.cont [2/8] 0, 128
        %429 = vxpose.xlu0.c.b16.cont [3/8] 0, 128
        %430 = vxpose.xlu0.c.b16.cont [4/8] 0, 128
        %431 = vxpose.xlu0.c.b16.cont [5/8] 0, 128
        %432 = vxpose.xlu0.c.b16.cont [6/8] 0, 128
        %433 = vxpose.xlu0.c.b16.cont [7/8] 0, 128
        %434 = vxpose.xlu0.c.b16.end [8/8] 0, 128
        %v435 = vpop.trf.xlu0
        %v436 = vpop.trf.xlu0
        %v437 = vpop.trf.xlu0
        %v438 = vpop.trf.xlu0
        %v439 = vpop.trf.xlu0
        %v440 = vpop.trf.xlu0
        %v441 = vpop.trf.xlu0
        %v442 = vpop.trf.xlu0
        %vm443 = vcmask 31744
        %v445 = vsel %vm443, %v419, 0
        %v448 = vsel %vm443, %v420, 0
        %v451 = vsel %vm443, %v421, 0
        %v454 = vsel %vm443, %v422, 0
        %v457 = vsel %vm443, %v423, 0
        %v460 = vsel %vm443, %v424, 0
        %v463 = vsel %vm443, %v425, 0
        %v466 = vsel %vm443, %v426, 0
        %v469 = vsel %vm443, %v435, 0
        %v472 = vsel %vm443, %v436, 0
        %v475 = vsel %vm443, %v437, 0
        %v478 = vsel %vm443, %v438, 0
        %v481 = vsel %vm443, %v439, 0
        %v484 = vsel %vm443, %v440, 0
        %v487 = vsel %vm443, %v441, 0
        %v490 = vsel %vm443, %v442, 0
        %vm492 = vcmask 1041408
        %v494 = vsel %vm492, %v399, 0
        %496 = vmatprep.subr.bf16.mxu0 0
        %497 = vmatpush1.bf16.msra.mxu0 %v494
        %498 = vmatprep.subr.bf16.mxu0 0
        %499 = vmatpush1.bf16.msra.mxu0 0
        %500 = vmatprep.subr.bf16.mxu0 0
        %501 = vmatpush1.bf16.msra.mxu0 0
        %502 = vmatprep.subr.bf16.mxu0 0
        %503 = vmatpush1.bf16.msra.mxu0 0
        %504 = vmatprep.subr.bf16.mxu0 0
        %505 = vmatpush1.bf16.msra.mxu0 0
        %506 = vmatprep.subr.bf16.mxu0 0
        %507 = vmatpush1.bf16.msra.mxu0 0
        %508 = vmatprep.subr.bf16.mxu0 0
        %509 = vmatpush1.bf16.msra.mxu0 0
        %510 = vmatprep.subr.bf16.mxu0 0
        %511 = vmatpush1.bf16.msra.mxu0 0
        %512 = vmatprep.subr.bf16.mxu0 0
        %513 = vmatpush1.bf16.msra.mxu0 0
        %514 = vmatprep.subr.bf16.mxu0 0
        %515 = vmatpush1.bf16.msra.mxu0 0
        %516 = vmatprep.subr.bf16.mxu0 0
        %517 = vmatpush1.bf16.msra.mxu0 0
        %518 = vmatprep.subr.bf16.mxu0 0
        %519 = vmatpush1.bf16.msra.mxu0 0
        %520 = vmatprep.subr.bf16.mxu0 0
        %521 = vmatpush1.bf16.msra.mxu0 0
        %522 = vmatprep.subr.bf16.mxu0 0
        %523 = vmatpush1.bf16.msra.mxu0 0
        %524 = vmatprep.subr.bf16.mxu0 0
        %525 = vmatpush1.bf16.msra.mxu0 0
        %526 = vmatprep.subr.bf16.mxu0 0
        %527 = vmatpush1.bf16.msra.mxu0 0
        %528 = vmatprep.mubr.bf16.mxu0 0
        %529 = vmatmul.mubr.bf16.gmra.mrb[0].mxu0 %v445
        %v530 = vpop.f32.mrb[0].mxu0
        %v531 = vadd.f32 0.0, %v530
        %v532 = vpop.f32.mrb[0].mxu0
        %v533 = vpop.f32.mrb[0].mxu0
        %v534 = vadd.f32 0.0, %v533
        %v535 = vpop.f32.mrb[0].mxu0
        %536 = vmatprep.mubr.bf16.mxu0 0
        %537 = vmatmul.mubr.bf16.gmra.mrb[0].mxu0 %v448
        %v538 = vpop.f32.mrb[0].mxu0
        %v539 = vadd.f32 0.0, %v538
        %v540 = vpop.f32.mrb[0].mxu0
        %v541 = vpop.f32.mrb[0].mxu0
        %v542 = vadd.f32 0.0, %v541
        %v543 = vpop.f32.mrb[0].mxu0
        %544 = vmatprep.mubr.bf16.mxu0 0
        %545 = vmatmul.mubr.bf16.gmra.mrb[0].mxu0 %v451
        %v546 = vpop.f32.mrb[0].mxu0
        %v547 = vadd.f32 0.0, %v546
        %v548 = vpop.f32.mrb[0].mxu0
        %v549 = vpop.f32.mrb[0].mxu0
        %v550 = vadd.f32 0.0, %v549
        %v551 = vpop.f32.mrb[0].mxu0
        %552 = vmatprep.mubr.bf16.mxu0 0
        %553 = vmatmul.mubr.bf16.gmra.mrb[0].mxu0 %v454
        %v554 = vpop.f32.mrb[0].mxu0
        %v555 = vadd.f32 0.0, %v554
        %v556 = vpop.f32.mrb[0].mxu0
        %v557 = vpop.f32.mrb[0].mxu0
        %v558 = vadd.f32 0.0, %v557
        %v559 = vpop.f32.mrb[0].mxu0
        %560 = vmatprep.mubr.bf16.mxu0 0
        %561 = vmatmul.mubr.bf16.gmra.mrb[0].mxu0 %v457
        %v562 = vpop.f32.mrb[0].mxu0
        %v563 = vadd.f32 0.0, %v562
        %v564 = vpop.f32.mrb[0].mxu0
        %v565 = vpop.f32.mrb[0].mxu0
        %v566 = vadd.f32 0.0, %v565
        %v567 = vpop.f32.mrb[0].mxu0
        %568 = vmatprep.mubr.bf16.mxu0 0
        %569 = vmatmul.mubr.bf16.gmra.mrb[0].mxu0 %v460
        %v570 = vpop.f32.mrb[0].mxu0
        %v571 = vadd.f32 0.0, %v570
        %v572 = vpop.f32.mrb[0].mxu0
        %v573 = vpop.f32.mrb[0].mxu0
        %v574 = vadd.f32 0.0, %v573
        %v575 = vpop.f32.mrb[0].mxu0
        %576 = vmatprep.mubr.bf16.mxu0 0
        %577 = vmatmul.mubr.bf16.gmra.mrb[0].mxu0 %v463
        %v578 = vpop.f32.mrb[0].mxu0
        %v579 = vadd.f32 0.0, %v578
        %v580 = vpop.f32.mrb[0].mxu0
        %v581 = vpop.f32.mrb[0].mxu0
        %v582 = vadd.f32 0.0, %v581
        %v583 = vpop.f32.mrb[0].mxu0
        %584 = vmatprep.mubr.bf16.mxu0 0
        %585 = vmatmul.mubr.bf16.gmra.mrb[0].mxu0 %v466
        %v586 = vpop.f32.mrb[0].mxu0
        %v587 = vadd.f32 0.0, %v586
        %v588 = vpop.f32.mrb[0].mxu0
        %v589 = vpop.f32.mrb[0].mxu0
        %v590 = vadd.f32 0.0, %v589
        %v591 = vpop.f32.mrb[0].mxu0
        %592 = vmatprep.mubr.bf16.mxu0 0
        %593 = vmatmul.mubr.bf16.gmra.mrb[0].mxu0 %v469
        %v594 = vpop.f32.mrb[0].mxu0
        %v595 = vadd.f32 0.0, %v594
        %v596 = vpop.f32.mrb[0].mxu0
        %v597 = vpop.f32.mrb[0].mxu0
        %v598 = vadd.f32 0.0, %v597
        %v599 = vpop.f32.mrb[0].mxu0
        %600 = vmatprep.mubr.bf16.mxu0 0
        %601 = vmatmul.mubr.bf16.gmra.mrb[0].mxu0 %v472
        %v602 = vpop.f32.mrb[0].mxu0
        %v603 = vadd.f32 0.0, %v602
        %v604 = vpop.f32.mrb[0].mxu0
        %v605 = vpop.f32.mrb[0].mxu0
        %v606 = vadd.f32 0.0, %v605
        %v607 = vpop.f32.mrb[0].mxu0
        %608 = vmatprep.mubr.bf16.mxu0 0
        %609 = vmatmul.mubr.bf16.gmra.mrb[0].mxu0 %v475
        %v610 = vpop.f32.mrb[0].mxu0
        %v611 = vadd.f32 0.0, %v610
        %v612 = vpop.f32.mrb[0].mxu0
        %v613 = vpop.f32.mrb[0].mxu0
        %v614 = vadd.f32 0.0, %v613
        %v615 = vpop.f32.mrb[0].mxu0
        %616 = vmatprep.mubr.bf16.mxu0 0
        %617 = vmatmul.mubr.bf16.gmra.mrb[0].mxu0 %v478
        %v618 = vpop.f32.mrb[0].mxu0
        %v619 = vadd.f32 0.0, %v618
        %v620 = vpop.f32.mrb[0].mxu0
        %v621 = vpop.f32.mrb[0].mxu0
        %v622 = vadd.f32 0.0, %v621
        %v623 = vpop.f32.mrb[0].mxu0
        %624 = vmatprep.mubr.bf16.mxu0 0
        %625 = vmatmul.mubr.bf16.gmra.mrb[0].mxu0 %v481
        %v626 = vpop.f32.mrb[0].mxu0
        %v627 = vadd.f32 0.0, %v626
        %v628 = vpop.f32.mrb[0].mxu0
        %v629 = vpop.f32.mrb[0].mxu0
        %v630 = vadd.f32 0.0, %v629
        %v631 = vpop.f32.mrb[0].mxu0
        %632 = vmatprep.mubr.bf16.mxu0 0
        %633 = vmatmul.mubr.bf16.gmra.mrb[0].mxu0 %v484
        %v634 = vpop.f32.mrb[0].mxu0
        %v635 = vadd.f32 0.0, %v634
        %v636 = vpop.f32.mrb[0].mxu0
        %v637 = vpop.f32.mrb[0].mxu0
        %v638 = vadd.f32 0.0, %v637
        %v639 = vpop.f32.mrb[0].mxu0
        %640 = vmatprep.mubr.bf16.mxu0 0
        %641 = vmatmul.mubr.bf16.gmra.mrb[0].mxu0 %v487
        %v642 = vpop.f32.mrb[0].mxu0
        %v643 = vadd.f32 0.0, %v642
        %v644 = vpop.f32.mrb[0].mxu0
        %v645 = vpop.f32.mrb[0].mxu0
        %v646 = vadd.f32 0.0, %v645
        %v647 = vpop.f32.mrb[0].mxu0
        %648 = vmatprep.mubr.bf16.mxu0 0
        %649 = vmatmul.mubr.bf16.gmra.mrb[0].mxu0 %v490
        %v650 = vpop.f32.mrb[0].mxu0
        %v651 = vadd.f32 0.0, %v650
        %v652 = vpop.f32.mrb[0].mxu0
        %v653 = vpop.f32.mrb[0].mxu0
        %v654 = vadd.f32 0.0, %v653
        %v655 = vpop.f32.mrb[0].mxu0
        %656 = vdwg.mxu0
        %v657 = vxor.u32 %v531, 2147483648
        %v658 = vxor.u32 %v534, 2147483648
        %v659 = vxor.u32 %v539, 2147483648
        %v660 = vxor.u32 %v542, 2147483648
        %v661 = vxor.u32 %v547, 2147483648
        %v662 = vxor.u32 %v550, 2147483648
        %v663 = vxor.u32 %v555, 2147483648
        %v664 = vxor.u32 %v558, 2147483648
        %v665 = vxor.u32 %v563, 2147483648
        %v666 = vxor.u32 %v566, 2147483648
        %v667 = vxor.u32 %v571, 2147483648
        %v668 = vxor.u32 %v574, 2147483648
        %v669 = vxor.u32 %v579, 2147483648
        %v670 = vxor.u32 %v582, 2147483648
        %v671 = vxor.u32 %v587, 2147483648
        %v672 = vxor.u32 %v590, 2147483648
        %v673 = vxor.u32 %v595, 2147483648
        %v674 = vxor.u32 %v598, 2147483648
        %v675 = vxor.u32 %v603, 2147483648
        %v676 = vxor.u32 %v606, 2147483648
        %v677 = vxor.u32 %v611, 2147483648
        %v678 = vxor.u32 %v614, 2147483648
        %v679 = vxor.u32 %v619, 2147483648
        %v680 = vxor.u32 %v622, 2147483648
        %v681 = vxor.u32 %v627, 2147483648
        %v682 = vxor.u32 %v630, 2147483648
        %v683 = vxor.u32 %v635, 2147483648
        %v684 = vxor.u32 %v638, 2147483648
        %v685 = vxor.u32 %v643, 2147483648
        %v686 = vxor.u32 %v646, 2147483648
        %v687 = vxor.u32 %v651, 2147483648
        %v688 = vxor.u32 %v654, 2147483648
        %v689 = vmul.f32 %v657, 1.442695
        %v690 = vpow.pop %v689
        %v691 = vmul.f32 %v658, 1.442695
        %v692 = vpow.pop %v691
        %v693 = vmul.f32 %v659, 1.442695
        %v694 = vpow.pop %v693
        %v695 = vmul.f32 %v660, 1.442695
        %v696 = vpow.pop %v695
        %v697 = vmul.f32 %v661, 1.442695
        %v698 = vpow.pop %v697
        %v699 = vmul.f32 %v662, 1.442695
        %v700 = vpow.pop %v699
        %v701 = vmul.f32 %v663, 1.442695
        %v702 = vpow.pop %v701
        %v703 = vmul.f32 %v664, 1.442695
        %v704 = vpow.pop %v703
        %v705 = vmul.f32 %v665, 1.442695
        %v706 = vpow.pop %v705
        %v707 = vmul.f32 %v666, 1.442695
        %v708 = vpow.pop %v707
        %v709 = vmul.f32 %v667, 1.442695
        %v710 = vpow.pop %v709
        %v711 = vmul.f32 %v668, 1.442695
        %v712 = vpow.pop %v711
        %v713 = vmul.f32 %v669, 1.442695
        %v714 = vpow.pop %v713
        %v715 = vmul.f32 %v670, 1.442695
        %v716 = vpow.pop %v715
        %v717 = vmul.f32 %v671, 1.442695
        %v718 = vpow.pop %v717
        %v719 = vmul.f32 %v672, 1.442695
        %v720 = vpow.pop %v719
        %v721 = vmul.f32 %v673, 1.442695
        %v722 = vpow.pop %v721
        %v723 = vmul.f32 %v674, 1.442695
        %v724 = vpow.pop %v723
        %v725 = vmul.f32 %v675, 1.442695
        %v726 = vpow.pop %v725
        %v727 = vmul.f32 %v676, 1.442695
        %v728 = vpow.pop %v727
        %v729 = vmul.f32 %v677, 1.442695
        %v730 = vpow.pop %v729
        %v731 = vmul.f32 %v678, 1.442695
        %v732 = vpow.pop %v731
        %v733 = vmul.f32 %v679, 1.442695
        %v734 = vpow.pop %v733
        %v735 = vmul.f32 %v680, 1.442695
        %v736 = vpow.pop %v735
        %v737 = vmul.f32 %v681, 1.442695
        %v738 = vpow.pop %v737
        %v739 = vmul.f32 %v682, 1.442695
        %v740 = vpow.pop %v739
        %v741 = vmul.f32 %v683, 1.442695
        %v742 = vpow.pop %v741
        %v743 = vmul.f32 %v684, 1.442695
        %v744 = vpow.pop %v743
        %v745 = vmul.f32 %v685, 1.442695
        %v746 = vpow.pop %v745
        %v747 = vmul.f32 %v686, 1.442695
        %v748 = vpow.pop %v747
        %v749 = vmul.f32 %v687, 1.442695
        %v750 = vpow.pop %v749
        %v751 = vmul.f32 %v688, 1.442695
        %v752 = vpow.pop %v751
        %v753 = vadd.f32 %v690, 1.0
        %v754 = vadd.f32 %v692, 1.0
        %v755 = vadd.f32 %v694, 1.0
        %v756 = vadd.f32 %v696, 1.0
        %v757 = vadd.f32 %v698, 1.0
        %v758 = vadd.f32 %v700, 1.0
        %v759 = vadd.f32 %v702, 1.0
        %v760 = vadd.f32 %v704, 1.0
        %v761 = vadd.f32 %v706, 1.0
        %v762 = vadd.f32 %v708, 1.0
        %v763 = vadd.f32 %v710, 1.0
        %v764 = vadd.f32 %v712, 1.0
        %v765 = vadd.f32 %v714, 1.0
        %v766 = vadd.f32 %v716, 1.0
        %v767 = vadd.f32 %v718, 1.0
        %v768 = vadd.f32 %v720, 1.0
        %v769 = vadd.f32 %v722, 1.0
        %v770 = vadd.f32 %v724, 1.0
        %v771 = vadd.f32 %v726, 1.0
        %v772 = vadd.f32 %v728, 1.0
        %v773 = vadd.f32 %v730, 1.0
        %v774 = vadd.f32 %v732, 1.0
        %v775 = vadd.f32 %v734, 1.0
        %v776 = vadd.f32 %v736, 1.0
        %v777 = vadd.f32 %v738, 1.0
        %v778 = vadd.f32 %v740, 1.0
        %v779 = vadd.f32 %v742, 1.0
        %v780 = vadd.f32 %v744, 1.0
        %v781 = vadd.f32 %v746, 1.0
        %v782 = vadd.f32 %v748, 1.0
        %v783 = vadd.f32 %v750, 1.0
        %v784 = vadd.f32 %v752, 1.0
        %v785 = vrcp.pop %v753
        %v786 = vmul.f32 1.0, %v785
        %v787 = vrcp.pop %v754
        %v788 = vmul.f32 1.0, %v787
        %v789 = vrcp.pop %v755
        %v790 = vmul.f32 1.0, %v789
        %v791 = vrcp.pop %v756
        %v792 = vmul.f32 1.0, %v791
        %v793 = vrcp.pop %v757
        %v794 = vmul.f32 1.0, %v793
        %v795 = vrcp.pop %v758
        %v796 = vmul.f32 1.0, %v795
        %v797 = vrcp.pop %v759
        %v798 = vmul.f32 1.0, %v797
        %v799 = vrcp.pop %v760
        %v800 = vmul.f32 1.0, %v799
        %v801 = vrcp.pop %v761
        %v802 = vmul.f32 1.0, %v801
        %v803 = vrcp.pop %v762
        %v804 = vmul.f32 1.0, %v803
        %v805 = vrcp.pop %v763
        %v806 = vmul.f32 1.0, %v805
        %v807 = vrcp.pop %v764
        %v808 = vmul.f32 1.0, %v807
        %v809 = vrcp.pop %v765
        %v810 = vmul.f32 1.0, %v809
        %v811 = vrcp.pop %v766
        %v812 = vmul.f32 1.0, %v811
        %v813 = vrcp.pop %v767
        %v814 = vmul.f32 1.0, %v813
        %v815 = vrcp.pop %v768
        %v816 = vmul.f32 1.0, %v815
        %v817 = vrcp.pop %v769
        %v818 = vmul.f32 1.0, %v817
        %v819 = vrcp.pop %v770
        %v820 = vmul.f32 1.0, %v819
        %v821 = vrcp.pop %v771
        %v822 = vmul.f32 1.0, %v821
        %v823 = vrcp.pop %v772
        %v824 = vmul.f32 1.0, %v823
        %v825 = vrcp.pop %v773
        %v826 = vmul.f32 1.0, %v825
        %v827 = vrcp.pop %v774
        %v828 = vmul.f32 1.0, %v827
        %v829 = vrcp.pop %v775
        %v830 = vmul.f32 1.0, %v829
        %v831 = vrcp.pop %v776
        %v832 = vmul.f32 1.0, %v831
        %v833 = vrcp.pop %v777
        %v834 = vmul.f32 1.0, %v833
        %v835 = vrcp.pop %v778
        %v836 = vmul.f32 1.0, %v835
        %v837 = vrcp.pop %v779
        %v838 = vmul.f32 1.0, %v837
        %v839 = vrcp.pop %v780
        %v840 = vmul.f32 1.0, %v839
        %v841 = vrcp.pop %v781
        %v842 = vmul.f32 1.0, %v841
        %v843 = vrcp.pop %v782
        %v844 = vmul.f32 1.0, %v843
        %v845 = vrcp.pop %v783
        %v846 = vmul.f32 1.0, %v845
        %v847 = vrcp.pop %v784
        %v848 = vmul.f32 1.0, %v847
        %v849 = vpack.c.bf16 %v788, %v786
        %v850 = vpack.c.bf16 %v792, %v790
        %v851 = vpack.c.bf16 %v796, %v794
        %v852 = vpack.c.bf16 %v800, %v798
        %v853 = vpack.c.bf16 %v804, %v802
        %v854 = vpack.c.bf16 %v808, %v806
        %v855 = vpack.c.bf16 %v812, %v810
        %v856 = vpack.c.bf16 %v816, %v814
        %v857 = vpack.c.bf16 %v820, %v818
        %v858 = vpack.c.bf16 %v824, %v822
        %v859 = vpack.c.bf16 %v828, %v826
        %v860 = vpack.c.bf16 %v832, %v830
        %v861 = vpack.c.bf16 %v836, %v834
        %v862 = vpack.c.bf16 %v840, %v838
        %v863 = vpack.c.bf16 %v844, %v842
        %v864 = vpack.c.bf16 %v848, %v846
        %v865 = vld [vmem:[%s373] sm:$0xff]
        %v866 = vld [vmem:[%s373 + $0x8] sm:$0xff]
        %v867 = vld [vmem:[%s373 + $0x10] sm:$0xff]
        %v868 = vld [vmem:[%s373 + $0x18] sm:$0xff]
        %v869 = vld [vmem:[%s373 + $0x20] sm:$0xff]
        %v870 = vld [vmem:[%s373 + $0x28] sm:$0xff]
        %v871 = vld [vmem:[%s373 + $0x30] sm:$0xff]
        %v872 = vld [vmem:[%s373 + $0x38] sm:$0xff]
        %v873 = vld [vmem:[%s329] sm:$0xf]
        %v874 = vld [vmem:[%s329 + $0x4] sm:$0xf]
        %v875 = vld [vmem:[%s329 + $0x8] sm:$0xf]
        %v876 = vld [vmem:[%s329 + $0xc] sm:$0xf]
        %v881 = vunpack.c.l.b16 %v873
        %v882 = vunpack.c.l.b16 %v874
        %v883 = vunpack.c.l.b16 %v875
        %v884 = vunpack.c.l.b16 %v876
        %v885 = vpack.c.b16 %v882, %v881
        %v886 = vpack.c.b16 %v884, %v883
        %889 = vmatprep.subr.bf16.mxu0 0
        %890 = vmatpush1.bf16.xpose.msra.mxu0 %v849
        %891 = vmatprep.subr.bf16.mxu0 0
        %892 = vmatpush1.bf16.xpose.msra.mxu0 %v850
        %893 = vmatprep.subr.bf16.mxu0 0
        %894 = vmatpush1.bf16.xpose.msra.mxu0 %v851
        %895 = vmatprep.subr.bf16.mxu0 0
        %896 = vmatpush1.bf16.xpose.msra.mxu0 %v852
        %897 = vmatprep.subr.bf16.mxu0 0
        %898 = vmatpush1.bf16.xpose.msra.mxu0 %v853
        %899 = vmatprep.subr.bf16.mxu0 0
        %900 = vmatpush1.bf16.xpose.msra.mxu0 %v854
        %901 = vmatprep.subr.bf16.mxu0 0
        %902 = vmatpush1.bf16.xpose.msra.mxu0 %v855
        %903 = vmatprep.subr.bf16.mxu0 0
        %904 = vmatpush1.bf16.xpose.msra.mxu0 %v856
        %905 = vmatprep.subr.bf16.mxu0 0
        %906 = vmatpush1.bf16.xpose.msra.mxu0 %v857
        %907 = vmatprep.subr.bf16.mxu0 0
        %908 = vmatpush1.bf16.xpose.msra.mxu0 %v858
        %909 = vmatprep.subr.bf16.mxu0 0
        %910 = vmatpush1.bf16.xpose.msra.mxu0 %v859
        %911 = vmatprep.subr.bf16.mxu0 0
        %912 = vmatpush1.bf16.xpose.msra.mxu0 %v860
        %913 = vmatprep.subr.bf16.mxu0 0
        %914 = vmatpush1.bf16.xpose.msra.mxu0 %v861
        %915 = vmatprep.subr.bf16.mxu0 0
        %916 = vmatpush1.bf16.xpose.msra.mxu0 %v862
        %917 = vmatprep.subr.bf16.mxu0 0
        %918 = vmatpush1.bf16.xpose.msra.mxu0 %v863
        %919 = vmatprep.subr.bf16.mxu0 0
        %920 = vmatpush1.bf16.xpose.msra.mxu0 %v864
        %921 = vmatprep.mubr.bf16.mxu0 0
        %922 = vmatmul.mubr.bf16.gmra.mrb[0].mxu0 %v885
        %v923 = vpop.f32.mrb[0].mxu0
        %v924 = vadd.f32 0.0, %v923
        %v925 = vpop.f32.mrb[0].mxu0
        %v926 = vadd.f32 0.0, %v925
        %v927 = vpop.f32.mrb[0].mxu0
        %v928 = vadd.f32 0.0, %v927
        %v929 = vpop.f32.mrb[0].mxu0
        %v930 = vadd.f32 0.0, %v929
        %931 = vmatprep.mubr.bf16.mxu0 0
        %932 = vmatmul.mubr.bf16.gmra.mrb[0].mxu0 %v886
        %v933 = vpop.f32.mrb[0].mxu0
        %v934 = vadd.f32 0.0, %v933
        %v935 = vpop.f32.mrb[0].mxu0
        %v936 = vadd.f32 0.0, %v935
        %v937 = vpop.f32.mrb[0].mxu0
        %v938 = vadd.f32 0.0, %v937
        %v939 = vpop.f32.mrb[0].mxu0
        %v940 = vadd.f32 0.0, %v939
        %941 = vdwg.mxu0
        %v942 = vadd.f32 %v865, %v924
        %v943 = vadd.f32 %v866, %v926
        %v944 = vadd.f32 %v867, %v928
        %v945 = vadd.f32 %v868, %v930
        %v946 = vadd.f32 %v869, %v934
        %v947 = vadd.f32 %v870, %v936
        %v948 = vadd.f32 %v871, %v938
        %v949 = vadd.f32 %v872, %v940
        %950 = vst [vmem:[%s373] sm:$0xff] %v942
        %951 = vst [vmem:[%s373 + $0x8] sm:$0xff] %v943
        %952 = vst [vmem:[%s373 + $0x10] sm:$0xff] %v944
        %953 = vst [vmem:[%s373 + $0x18] sm:$0xff] %v945
        %954 = vst [vmem:[%s373 + $0x20] sm:$0xff] %v946
        %955 = vst [vmem:[%s373 + $0x28] sm:$0xff] %v947
        %956 = vst [vmem:[%s373 + $0x30] sm:$0xff] %v948
        %957 = vst [vmem:[%s373 + $0x38] sm:$0xff] %v949
        %p958 = scmp.eq.s32.totalorder %s33, 1
        // Predicated region
        $region57: #{tpu_custom_call.1} parent=39 // pred_check
          %p959 = pneg %p958
        $region58: #{tpu_custom_call.1} parent=39 // pred_check_branch
          %961 = sbr.rel (%p959) target = $region60
        $region59: #{tpu_custom_call.1} parent=39 // pred_region
          %s962 = sld [smem:[#allocation2]]
          %v963 = vld [vmem:[%s373] sm:$0xff]
          %v964 = vld [vmem:[%s373 + $0x8] sm:$0xff]
          %v965 = vld [vmem:[%s373 + $0x10] sm:$0xff]
          %v966 = vld [vmem:[%s373 + $0x18] sm:$0xff]
          %v967 = vld [vmem:[%s373 + $0x20] sm:$0xff]
          %v968 = vld [vmem:[%s373 + $0x28] sm:$0xff]
          %v969 = vld [vmem:[%s373 + $0x30] sm:$0xff]
          %v970 = vld [vmem:[%s373 + $0x38] sm:$0xff]
          %v971 = vstv %s962
          %v972 = vmul.f32 %v971, %v963
          %v973 = vmul.f32 %v971, %v964
          %v974 = vmul.f32 %v971, %v965
          %v975 = vmul.f32 %v971, %v966
          %v976 = vmul.f32 %v971, %v967
          %v977 = vmul.f32 %v971, %v968
          %v978 = vmul.f32 %v971, %v969
          %v979 = vmul.f32 %v971, %v970
          %v980 = vld [vmem:[%s311] sm:$0xff]
          %v981 = vld [vmem:[%s311 + $0x8] sm:$0xff]
          %v982 = vld [vmem:[%s311 + $0x10] sm:$0xff]
          %v983 = vld [vmem:[%s311 + $0x18] sm:$0xff]
          %v984 = vld [vmem:[%s311 + $0x20] sm:$0xff]
          %v985 = vld [vmem:[%s311 + $0x28] sm:$0xff]
          %v986 = vld [vmem:[%s311 + $0x30] sm:$0xff]
          %v987 = vld [vmem:[%s311 + $0x38] sm:$0xff]
          %v988 = vadd.f32 %v972, %v980
          %v989 = vadd.f32 %v973, %v981
          %v990 = vadd.f32 %v974, %v982
          %v991 = vadd.f32 %v975, %v983
          %v992 = vadd.f32 %v976, %v984
          %v993 = vadd.f32 %v977, %v985
          %v994 = vadd.f32 %v978, %v986
          %v995 = vadd.f32 %v979, %v987
          %996 = vst [vmem:[%s373] sm:$0xff] %v988
          %997 = vst [vmem:[%s373 + $0x8] sm:$0xff] %v989
          %998 = vst [vmem:[%s373 + $0x10] sm:$0xff] %v990
          %999 = vst [vmem:[%s373 + $0x18] sm:$0xff] %v991
          %1000 = vst [vmem:[%s373 + $0x20] sm:$0xff] %v992
          %1001 = vst [vmem:[%s373 + $0x28] sm:$0xff] %v993
          %1002 = vst [vmem:[%s373 + $0x30] sm:$0xff] %v994
          %1003 = vst [vmem:[%s373 + $0x38] sm:$0xff] %v995
        $region60: #{tpu_custom_call.1} parent=39 // pred_fallthru
          _
        %s1004 = sand.u32 %s188, 1
        %s1005 = scalar_lea.sflag [#allocation5], %s1004
        %s1006 = sand.u32 %s188, 1
        %s1007 = smul.addr %s1006, 64
        %s1008 = scalar_lea.vmem [#allocation9], %s1007
        // Predicated region
        $region61: #{tpu_custom_call.1} parent=39 // pred_check
          %p1009 = pneg %p198
        $region62: #{tpu_custom_call.1} parent=39 // pred_check_branch
          %1011 = sbr.rel (%p1009) target = $region64
        $region63: #{tpu_custom_call.1} parent=39 // pred_region
          %s1012 = smul.u32 2, %s32
          %s1014 = ssub.s32 1024, 1024
          %1015 = vsyncadd %s1005, %s1014
          %s1016 = smul.addr %s31, 8
          %s1017 = sadd.s32 %s1012, %s1016
          %s1018 = smul.addr %s1017, 128
          %s1019 = scalar_lea.hbm %s5, %s1018
          %s1020 = sshll.u32 %s1008, 4
          %s1021 = int_to_ptr.vmem [resolvable:$true] %s1020
          %1026 = dma.vmem_to_hbm [thread:$0]  %s1021, 1024, %s1019, %s1005, 256, 256, 16
        $region64: #{tpu_custom_call.1} parent=39 // pred_fallthru
          _
      $region40: #{tpu_custom_call.1} parent=5 // pred_fallthru
        _
      %p1027 = scmp.le.s32.totalorder 2, %s21
      // Predicated region
      $region65: #{tpu_custom_call.1} parent=5 // pred_check
        %p1028 = pneg %p1027
      $region66: #{tpu_custom_call.1} parent=5 // pred_check_branch
        %1030 = sbr.rel (%p1028) target = $region68
      $region67: #{tpu_custom_call.1} parent=5 // pred_region
        %s1031 = ssub.s32 %s21, 2
        // Predicated region
        $region69: #{tpu_custom_call.1} parent=67 // pred_check
          %p1032 = pneg %p204
        $region70: #{tpu_custom_call.1} parent=67 // pred_check_branch
          %1034 = sbr.rel (%p1032) target = $region72
        $region71: #{tpu_custom_call.1} parent=67 // pred_region
          %s1035 = sand.u32 %s189, 1
          %s1036 = scalar_lea.sflag [#allocation5], %s1035
          %s1037 = sand.u32 %s189, 1
          %s1038 = smul.addr %s1037, 64
          %s1039 = scalar_lea.vmem [#allocation9], %s1038
          %1040 = dma.done %s1036, 1024
        $region72: #{tpu_custom_call.1} parent=67 // pred_fallthru
          _
      $region68: #{tpu_custom_call.1} parent=5 // pred_fallthru
        _
    $region6: #{tpu_custom_call.1} parent=1 // loop_footer
      %s25 = sadd.s32 1, %s21
    $region7: #{tpu_custom_call.1} parent=1 // loop_footer_branch
      %20 = sbr.rel target = $region3
    $region8: #{tpu_custom_call.1} parent=1 // loop_exit
      _
    %1041 = vsyncpa [#allocation4], 1
    %s1042 = scalar_lea.sflag [#allocation4], 1
    %1043 = vsyncpa %s1042, 1
    %1044 = vsyncpa [#allocation7], 1
    %s1045 = scalar_lea.sflag [#allocation7], 1
    %1046 = vsyncpa %s1045, 1
    %1047 = vsyncpa [#allocation5], 1
    %s1048 = scalar_lea.sflag [#allocation5], 1
    %1049 = vsyncpa %s1048, 1

</llo_original>
